<compile_context>
chip_gen: v7x
topology: tpu7x:2x2x1
jax: 0.10.0
libtpu: 0.0.40
codegen_flags: <defaults>
</compile_context>

<pallas_src>
import functools

import jax
import jax.numpy as jnp
from jax.experimental import pallas as pl
from jax.experimental.pallas import tpu as pltpu


_HIDDEN = 64
_VMEM_LIMIT_BYTES = 32 * 1024 * 1024      # scoped VMEM limit (fits v5e/v6e/v7x)
_STREAM_BUDGET_BYTES = 20 * 1024 * 1024   # budget for streaming blocks + temps


def _round_up(n, m):
    return ((n + m - 1) // m) * m


def default_pack_factor():
    """4-row packing for 256x256-MXU chips (v6e/v7x), 2 for 128x128-MXU chips."""
    try:
        kind = jax.devices()[0].device_kind.lower()
    except Exception:
        return 4
    if any(tag in kind for tag in ("v2", "v3", "v4", "v5")):
        return 2
    return 4


def pack_params(params, pack):
    """Precompute fused-head + block-diagonal batch-packed weights (run once).

    params holds torch-Linear-equivalent weights stored as (in_features,
    out_features) and (1, out_features) biases.
    """
    eye = jnp.eye(pack, dtype=params["w1"].dtype)
    wh = jnp.concatenate([params["wp"], params["wv"]], axis=1)   # (64, L+1)
    bh = jnp.concatenate([params["bp"], params["bv"]], axis=1)   # (1,  L+1)
    bd = lambda w: jnp.kron(eye, w)          # block-diagonal (P*in, P*out)
    tl = lambda b: jnp.tile(b, (1, pack))    # (1, P*out)
    return {
        "w1": bd(params["w1"]), "b1": tl(params["b1"]),
        "w2": bd(params["w2"]), "b2": tl(params["b2"]),
        "wh": bd(wh),           "bh": tl(bh),
    }


def _policy_value_kernel(x_ref, w1_ref, b1_ref, w2_ref, b2_ref,
                         wh_ref, bh_ref, out_ref):
    """Fused 3-matmul MLP on batch-packed rows (block-diagonal weights)."""
    # TODO(synk): optional bf16 operand cast (opt-in; would loosen tolerances).
    h = jnp.dot(x_ref[...], w1_ref[...],
                preferred_element_type=jnp.float32) + b1_ref[...]
    h = jnp.maximum(h, 0.0)
    h = jnp.dot(h, w2_ref[...],
                preferred_element_type=jnp.float32) + b2_ref[...]
    h = jnp.maximum(h, 0.0)
    out_ref[...] = (jnp.dot(h, wh_ref[...],
                            preferred_element_type=jnp.float32)
                    + bh_ref[...]).astype(out_ref.dtype)


@functools.partial(jax.jit, static_argnames=("pack", "max_rows"))
def single_policy_value_net(x, packed, *, pack, max_rows=8192):
    """Run the fused, batch-packed policy/value MLP.

    Args:
      x: (B, 2*dim) float32.
      packed: output of pack_params(params, pack).
      pack: static batch-pack factor used to build `packed`.
      max_rows: max ORIGINAL batch rows processed per grid step.
    Returns:
      {'policy': (B, num_layers) f32, 'value': (B, 1) f32}
    """
    B, in_feat = x.shape
    pf = packed["w1"].shape[0]            # pack * in_feat
    hp = packed["w1"].shape[1]            # pack * 64
    nh = packed["wh"].shape[1]            # pack * (num_layers + 1)
    assert pf == pack * in_feat, "packed params do not match x / pack factor"
    num_layers = nh // pack - 1

    # Pad only when B is not a multiple of the pack factor (<= pack-1 rows).
    B_p = _round_up(B, pack)
    if B_p != B:
        x = jnp.concatenate([x, jnp.zeros((B_p - B, in_feat), x.dtype)], axis=0)

    # Free row-major reinterpretation: `pack` consecutive rows -> one packed row.
    b_pack = B_p // pack
    xp = x.reshape(b_pack, pf)

    # Batch tile: as large as possible (amortize per-step overhead), capped by a
    # VMEM budget for the double-buffered streaming blocks + f32 intermediates.
    lanes = lambda n: _round_up(n, 128)
    per_row_bytes = 4 * (2 * lanes(pf) + 2 * lanes(nh) + 2 * lanes(hp))
    cap = max(8, (_STREAM_BUDGET_BYTES // per_row_bytes) // 8 * 8)
    max_tb = max(8, min(max_rows // pack, cap) // 8 * 8)
    # Block == full first dim when it fits (any size allowed), else an 8-aligned
    # tile with pl.cdiv + Pallas masking of the ragged last block.
    tb = b_pack if b_pack <= max_tb else max_tb
    grid = (pl.cdiv(b_pack, tb),)

    x_spec = pl.BlockSpec((tb, pf), lambda i: (i, 0))
    out_spec = pl.BlockSpec((tb, nh), lambda i: (i, 0))
    # Constant index_maps -> weights DMA'd once, resident across the batch grid.
    resident = lambda a: pl.BlockSpec(a.shape, lambda i: (0, 0))

    w1, b1, w2, b2, wh, bh = (packed[k]
                              for k in ("w1", "b1", "w2", "b2", "wh", "bh"))

    weight_bytes = sum(int(a.size) * a.dtype.itemsize
                       for a in (w1, b1, w2, b2, wh, bh))
    flops = 2 * b_pack * (pf * hp + hp * hp + hp * nh)
    bytes_accessed = b_pack * (pf + nh) * 4 + weight_bytes

    out = pl.pallas_call(
        _policy_value_kernel,
        out_shape=jax.ShapeDtypeStruct((b_pack, nh), jnp.float32),
        grid=grid,
        in_specs=[x_spec,
                  resident(w1), resident(b1),
                  resident(w2), resident(b2),
                  resident(wh), resident(bh)],
        out_specs=out_spec,
        compiler_params=pltpu.CompilerParams(
            dimension_semantics=("parallel",),
            vmem_limit_bytes=_VMEM_LIMIT_BYTES),
        cost_estimate=pl.CostEstimate(
            flops=flops, transcendentals=0, bytes_accessed=bytes_accessed),
    )(xp, w1, b1, w2, b2, wh, bh)

    out = out.reshape(B_p, num_layers + 1)[:B]   # free un-packing reshape + slice
    return {"policy": out[:, :num_layers], "value": out[:, num_layers:]}


def init_params(key, dim, num_layers):
    """PyTorch nn.Linear-style init (uniform +/- 1/sqrt(fan_in)).

    Weights are stored as (in_features, out_features) — i.e. pre-transposed
    relative to torch's nn.Linear.weight — so the kernel computes x @ W.
    """
    def linear(k, fan_in, fan_out):
        kw, kb = jax.random.split(k)
        bound = 1.0 / jnp.sqrt(jnp.float32(fan_in))
        w = jax.random.uniform(kw, (fan_in, fan_out), jnp.float32, -bound, bound)
        b = jax.random.uniform(kb, (1, fan_out), jnp.float32, -bound, bound)
        return w, b

    k1, k2, k3, k4 = jax.random.split(key, 4)
    w1, b1 = linear(k1, dim * 2, _HIDDEN)
    w2, b2 = linear(k2, _HIDDEN, _HIDDEN)
    wp, bp = linear(k3, _HIDDEN, num_layers)
    wv, bv = linear(k4, _HIDDEN, 1)
    # NOTE: fc1_/fc2_ from __init__ are intentionally omitted — unused in forward.
    return {"w1": w1, "b1": b1, "w2": w2, "b2": b2,
            "wp": wp, "bp": bp, "wv": wv, "bv": bv}


def _reference(x, params):
    h = jnp.maximum(x @ params["w1"] + params["b1"], 0.0)
    h = jnp.maximum(h @ params["w2"] + params["b2"], 0.0)
    return h @ params["wp"] + params["bp"], h @ params["wv"] + params["bv"]


if __name__ == "__main__":
    dim = 16          # -> input features = 2*dim = 32
    num_layers = 8    # policy head output size
    batch = 8         # tiny smoke-test batch

    key = jax.random.PRNGKey(0)
    k_params, k_x = jax.random.split(key)

    params = init_params(k_params, dim, num_layers)
    pack = default_pack_factor()
    packed = pack_params(params, pack)        # once, at parameter-load time

    x = jax.random.normal(k_x, (batch, dim * 2), jnp.float32)
    out = single_policy_value_net(x, packed, pack=pack)
    jax.block_until_ready(out)

    ref_p, ref_v = _reference(x, params)
    assert out["policy"].shape == (batch, num_layers)
    assert out["value"].shape == (batch, 1)
    assert jnp.allclose(out["policy"], ref_p, atol=1e-5, rtol=1e-5)
    assert jnp.allclose(out["value"], ref_v, atol=1e-5, rtol=1e-5)

    # Ragged batch (not a multiple of pack) and a forced multi-tile grid whose
    # last block is partial (exercises pl.cdiv + masked writeback path).
    x_big = jax.random.normal(jax.random.PRNGKey(1), (2051, dim * 2), jnp.float32)
    rp, rv = _reference(x_big, params)
    for mr in (8192, 512):
        out_big = single_policy_value_net(x_big, packed, pack=pack, max_rows=mr)
        jax.block_until_ready(out_big)
        assert out_big["policy"].shape == (2051, num_layers)
        assert out_big["value"].shape == (2051, 1)
        assert jnp.allclose(out_big["policy"], rp, atol=1e-5, rtol=1e-5)
        assert jnp.allclose(out_big["value"], rv, atol=1e-5, rtol=1e-5)

    print("KERNEL_OK")
</pallas_src>

<mosaic_0001>
module attributes {stable_mosaic.version = 11 : i64} {
  func.func @_policy_value_kernel(%arg0: i32, %arg1: memref<2x128xf32, #tpu.memory_space<vmem>>, %arg2: memref<128x256xf32, #tpu.memory_space<vmem>>, %arg3: memref<1x256xf32, #tpu.memory_space<vmem>>, %arg4: memref<256x256xf32, #tpu.memory_space<vmem>>, %arg5: memref<1x256xf32, #tpu.memory_space<vmem>>, %arg6: memref<256x36xf32, #tpu.memory_space<vmem>>, %arg7: memref<1x36xf32, #tpu.memory_space<vmem>>, %arg8: memref<2x36xf32, #tpu.memory_space<vmem>>) attributes {dimension_semantics = [#tpu.dimension_semantics<parallel>], iteration_bounds = array<i64: 1>, scalar_prefetch = 0 : i64, scratch_operands = 0 : i64, tpu.core_type = #tpu.core_type<tc>, window_params = [{transform_indices = @transform_0, window_bounds = array<i64: 2, 128>}, {pipeline_mode = #tpu.pipeline_mode<synchronous>, transform_indices = @transform_1, window_bounds = array<i64: 128, 256>}, {pipeline_mode = #tpu.pipeline_mode<synchronous>, transform_indices = @transform_2, window_bounds = array<i64: 1, 256>}, {pipeline_mode = #tpu.pipeline_mode<synchronous>, transform_indices = @transform_3, window_bounds = array<i64: 256, 256>}, {pipeline_mode = #tpu.pipeline_mode<synchronous>, transform_indices = @transform_4, window_bounds = array<i64: 1, 256>}, {pipeline_mode = #tpu.pipeline_mode<synchronous>, transform_indices = @transform_5, window_bounds = array<i64: 256, 36>}, {pipeline_mode = #tpu.pipeline_mode<synchronous>, transform_indices = @transform_6, window_bounds = array<i64: 1, 36>}, {transform_indices = @transform_7, window_bounds = array<i64: 2, 36>}]} {
    %c0 = arith.constant 0 : index
    %c0_0 = arith.constant 0 : index
    %0 = vector.load %arg1[%c0, %c0_0] : memref<2x128xf32, #tpu.memory_space<vmem>>, vector<2x128xf32>
    %c0_1 = arith.constant 0 : index
    %c0_2 = arith.constant 0 : index
    %1 = vector.load %arg2[%c0_1, %c0_2] : memref<128x256xf32, #tpu.memory_space<vmem>>, vector<128x256xf32>
    %cst = arith.constant dense<0.000000e+00> : vector<2x256xf32>
    %2 = tpu.matmul %0, %1, %cst {dimension_numbers = #tpu.dot_dimension_numbers<[1], [0], [0], [1], [0, 0, 1, 1], [], []>} : vector<2x128xf32>, vector<128x256xf32>, vector<2x256xf32> -> vector<2x256xf32>
    %c0_3 = arith.constant 0 : index
    %c0_4 = arith.constant 0 : index
    %3 = vector.load %arg3[%c0_3, %c0_4] : memref<1x256xf32, #tpu.memory_space<vmem>>, vector<1x256xf32>
    %4 = vector.broadcast %3 : vector<1x256xf32> to vector<2x256xf32>
    %5 = arith.addf %2, %4 : vector<2x256xf32>
    %cst_5 = arith.constant 0.000000e+00 : f32
    %6 = vector.broadcast %cst_5 : f32 to vector<2x256xf32>
    %7 = arith.maximumf %5, %6 : vector<2x256xf32>
    %c0_6 = arith.constant 0 : index
    %c0_7 = arith.constant 0 : index
    %8 = vector.load %arg4[%c0_6, %c0_7] : memref<256x256xf32, #tpu.memory_space<vmem>>, vector<256x256xf32>
    %cst_8 = arith.constant dense<0.000000e+00> : vector<2x256xf32>
    %9 = tpu.matmul %7, %8, %cst_8 {dimension_numbers = #tpu.dot_dimension_numbers<[1], [0], [0], [1], [0, 0, 1, 1], [], []>} : vector<2x256xf32>, vector<256x256xf32>, vector<2x256xf32> -> vector<2x256xf32>
    %c0_9 = arith.constant 0 : index
    %c0_10 = arith.constant 0 : index
    %10 = vector.load %arg5[%c0_9, %c0_10] : memref<1x256xf32, #tpu.memory_space<vmem>>, vector<1x256xf32>
    %11 = vector.broadcast %10 : vector<1x256xf32> to vector<2x256xf32>
    %12 = arith.addf %9, %11 : vector<2x256xf32>
    %cst_11 = arith.constant 0.000000e+00 : f32
    %13 = vector.broadcast %cst_11 : f32 to vector<2x256xf32>
    %14 = arith.maximumf %12, %13 : vector<2x256xf32>
    %c0_12 = arith.constant 0 : index
    %c0_13 = arith.constant 0 : index
    %15 = vector.load %arg6[%c0_12, %c0_13] : memref<256x36xf32, #tpu.memory_space<vmem>>, vector<256x36xf32>
    %cst_14 = arith.constant dense<0.000000e+00> : vector<2x36xf32>
    %16 = tpu.matmul %14, %15, %cst_14 {dimension_numbers = #tpu.dot_dimension_numbers<[1], [0], [0], [1], [0, 0, 1, 1], [], []>} : vector<2x256xf32>, vector<256x36xf32>, vector<2x36xf32> -> vector<2x36xf32>
    %c0_15 = arith.constant 0 : index
    %c0_16 = arith.constant 0 : index
    %17 = vector.load %arg7[%c0_15, %c0_16] : memref<1x36xf32, #tpu.memory_space<vmem>>, vector<1x36xf32>
    %18 = vector.broadcast %17 : vector<1x36xf32> to vector<2x36xf32>
    %19 = arith.addf %16, %18 : vector<2x36xf32>
    %c0_17 = arith.constant 0 : index
    %c0_18 = arith.constant 0 : index
    %20 = vector.load %arg8[%c0_17, %c0_18] : memref<2x36xf32, #tpu.memory_space<vmem>>, vector<2x36xf32>
    tpu.vector_store %arg8[%c0_17, %c0_18], %19 {strides = array<i32>} : memref<2x36xf32, #tpu.memory_space<vmem>>, vector<2x36xf32>,
    return
  }
  func.func @transform_0(%arg0: i32) -> (i32, i32) {
    %c0_i32 = arith.constant 0 : i32
    %c0_i32_0 = arith.constant 0 : i32
    return %arg0, %c0_i32 : i32, i32
  }
  func.func @transform_1(%arg0: i32) -> (i32, i32) {
    %c0_i32 = arith.constant 0 : i32
    %c0_i32_0 = arith.constant 0 : i32
    %c0_i32_1 = arith.constant 0 : i32
    return %c0_i32, %c0_i32_0 : i32, i32
  }
  func.func @transform_2(%arg0: i32) -> (i32, i32) {
    %c0_i32 = arith.constant 0 : i32
    %c0_i32_0 = arith.constant 0 : i32
    %c0_i32_1 = arith.constant 0 : i32
    return %c0_i32, %c0_i32_0 : i32, i32
  }
  func.func @transform_3(%arg0: i32) -> (i32, i32) {
    %c0_i32 = arith.constant 0 : i32
    %c0_i32_0 = arith.constant 0 : i32
    %c0_i32_1 = arith.constant 0 : i32
    return %c0_i32, %c0_i32_0 : i32, i32
  }
  func.func @transform_4(%arg0: i32) -> (i32, i32) {
    %c0_i32 = arith.constant 0 : i32
    %c0_i32_0 = arith.constant 0 : i32
    %c0_i32_1 = arith.constant 0 : i32
    return %c0_i32, %c0_i32_0 : i32, i32
  }
  func.func @transform_5(%arg0: i32) -> (i32, i32) {
    %c0_i32 = arith.constant 0 : i32
    %c0_i32_0 = arith.constant 0 : i32
    %c0_i32_1 = arith.constant 0 : i32
    return %c0_i32, %c0_i32_0 : i32, i32
  }
  func.func @transform_6(%arg0: i32) -> (i32, i32) {
    %c0_i32 = arith.constant 0 : i32
    %c0_i32_0 = arith.constant 0 : i32
    %c0_i32_1 = arith.constant 0 : i32
    return %c0_i32, %c0_i32_0 : i32, i32
  }
  func.func @transform_7(%arg0: i32) -> (i32, i32) {
    %c0_i32 = arith.constant 0 : i32
    %c0_i32_0 = arith.constant 0 : i32
    return %arg0, %c0_i32 : i32, i32
  }
}

</mosaic_0001>

<llo_original>
// kernel: single_policy_value_net.1
$region0: #{single_policy_value_net.1}
  #allocation0 [shape = 'u32[]', space=smem, size = 0x4, offset = 0x4, fixed_abs, tag = 'smem constant byte address 0x4 - core index']
  #allocation1 [shape = 'u32[144,128]{1,0:T(1,128)}', space=vmem, size = 0x12000, scoped, tag = 'internal scratch']
  %s0 = inlined_call_operand.vmem [shape: f32[2,128], index: 0, kind: input, shape index: {}]
  %s1 = inlined_call_operand.vmem [shape: f32[128,256], index: 1, kind: input, shape index: {}]
  %s2 = inlined_call_operand.vmem [shape: f32[1,256], index: 2, kind: input, shape index: {}]
  %s3 = inlined_call_operand.hbm [shape: f32[256,256], index: 3, kind: input, shape index: {}]
  %s4 = inlined_call_operand.vmem [shape: f32[1,256], index: 4, kind: input, shape index: {}]
  %s5 = inlined_call_operand.vmem [shape: f32[256,36], index: 5, kind: input, shape index: {}]
  %s6 = inlined_call_operand.vmem [shape: f32[1,36], index: 6, kind: input, shape index: {}]
  %s7 = inlined_call_operand.vmem [shape: f32[2,36], index: 7, kind: output, shape index: {}]
  %s8 = sld [smem:[#allocation0]]
  $region42: #{single_policy_value_net.1} parent=0
    _
  %s10 = ssub.s32 1, %s8
  %s11 = scalar_select 0, %s10, %s8
  $region1: #{single_policy_value_net.1} parent=0
    #allocation2 [shape = 'u8[262144]{0}', space=vmem, size = 0x40000, scoped, tag = 'input window, operand 3, single buffered']
    #allocation3 [shape = 's32[1]{0}', space=sflag, size = 0x4, scoped, tag = 'scoped memory for single_policy_value_net.1']
    %12 = vsyncpa [#allocation3], 0
    // Predicated region
    $region2: #{single_policy_value_net.1} parent=1 // pred_check
      _
    $region3: #{single_policy_value_net.1} parent=1 // pred_check_branch
      %14 = sbr.rel (0) target = $region5
    $region4: #{single_policy_value_net.1} parent=1 // pred_region
      _
    $region5: #{single_policy_value_net.1} parent=1 // pred_fallthru
      _
    // Predicated region
    $region6: #{single_policy_value_net.1} parent=1 // pred_check
      _
    $region7: #{single_policy_value_net.1} parent=1 // pred_check_branch
      %16 = sbr.rel (0) target = $region9
    $region8: #{single_policy_value_net.1} parent=1 // pred_region
      _
    $region9: #{single_policy_value_net.1} parent=1 // pred_fallthru
      _
    // Predicated region
    $region10: #{single_policy_value_net.1} parent=1 // pred_check
      _
    $region11: #{single_policy_value_net.1} parent=1 // pred_check_branch
      %18 = sbr.rel (0) target = $region13
    $region12: #{single_policy_value_net.1} parent=1 // pred_region
      _
    $region13: #{single_policy_value_net.1} parent=1 // pred_fallthru
      _
    // Predicated region
    $region14: #{single_policy_value_net.1} parent=1 // pred_check
      _
    $region15: #{single_policy_value_net.1} parent=1 // pred_check_branch
      %20 = sbr.rel (0) target = $region17
    $region16: #{single_policy_value_net.1} parent=1 // pred_region
      %s22 = ssub.s32 8192, 8192
      %23 = vsyncadd [#allocation3], %s22
      %s24 = sshll.u32 [#allocation2], 4
      %s25 = int_to_ptr.vmem [resolvable:$true] %s24
      %30 = dma.hbm_to_vmem [thread:$0]  %s3, 8192, %s25, [#allocation3], 256, 256, 16
    $region17: #{single_policy_value_net.1} parent=1 // pred_fallthru
      _
    // Predicated region
    $region18: #{single_policy_value_net.1} parent=1 // pred_check
      _
    $region19: #{single_policy_value_net.1} parent=1 // pred_check_branch
      %32 = sbr.rel (0) target = $region21
    $region20: #{single_policy_value_net.1} parent=1 // pred_region
      _
    $region21: #{single_policy_value_net.1} parent=1 // pred_fallthru
      _
    // Predicated region
    $region22: #{single_policy_value_net.1} parent=1 // pred_check
      _
    $region23: #{single_policy_value_net.1} parent=1 // pred_check_branch
      %34 = sbr.rel (0) target = $region25
    $region24: #{single_policy_value_net.1} parent=1 // pred_region
      _
    $region25: #{single_policy_value_net.1} parent=1 // pred_fallthru
      _
    // Predicated region
    $region26: #{single_policy_value_net.1} parent=1 // pred_check
      _
    $region27: #{single_policy_value_net.1} parent=1 // pred_check_branch
      %36 = sbr.rel (0) target = $region29
    $region28: #{single_policy_value_net.1} parent=1 // pred_region
      _
    $region29: #{single_policy_value_net.1} parent=1 // pred_fallthru
      _
    // Predicated region
    $region30: #{single_policy_value_net.1} parent=1 // pred_check
      _
    $region31: #{single_policy_value_net.1} parent=1 // pred_check_branch
      %38 = sbr.rel (0) target = $region33
    $region32: #{single_policy_value_net.1} parent=1 // pred_region
      %39 = dma.done [#allocation3], 8192
    $region33: #{single_policy_value_net.1} parent=1 // pred_fallthru
      _
    %v40 = vld [vmem:[%s0] sm:$0x3]
    %v41 = vld [vmem:[%s1] sm:$0xff]
    %v42 = vld [vmem:[%s1 + $0x8] sm:$0xff]
    %v43 = vld [vmem:[%s1 + $0x10] sm:$0xff]
    %v44 = vld [vmem:[%s1 + $0x18] sm:$0xff]
    %v45 = vld [vmem:[%s1 + $0x20] sm:$0xff]
    %v46 = vld [vmem:[%s1 + $0x28] sm:$0xff]
    %v47 = vld [vmem:[%s1 + $0x30] sm:$0xff]
    %v48 = vld [vmem:[%s1 + $0x38] sm:$0xff]
    %v49 = vld [vmem:[%s1 + $0x40] sm:$0xff]
    %v50 = vld [vmem:[%s1 + $0x48] sm:$0xff]
    %v51 = vld [vmem:[%s1 + $0x50] sm:$0xff]
    %v52 = vld [vmem:[%s1 + $0x58] sm:$0xff]
    %v53 = vld [vmem:[%s1 + $0x60] sm:$0xff]
    %v54 = vld [vmem:[%s1 + $0x68] sm:$0xff]
    %v55 = vld [vmem:[%s1 + $0x70] sm:$0xff]
    %v56 = vld [vmem:[%s1 + $0x78] sm:$0xff]
    %v57 = vld [vmem:[%s1 + $0x80] sm:$0xff]
    %v58 = vld [vmem:[%s1 + $0x88] sm:$0xff]
    %v59 = vld [vmem:[%s1 + $0x90] sm:$0xff]
    %v60 = vld [vmem:[%s1 + $0x98] sm:$0xff]
    %v61 = vld [vmem:[%s1 + $0xa0] sm:$0xff]
    %v62 = vld [vmem:[%s1 + $0xa8] sm:$0xff]
    %v63 = vld [vmem:[%s1 + $0xb0] sm:$0xff]
    %v64 = vld [vmem:[%s1 + $0xb8] sm:$0xff]
    %v65 = vld [vmem:[%s1 + $0xc0] sm:$0xff]
    %v66 = vld [vmem:[%s1 + $0xc8] sm:$0xff]
    %v67 = vld [vmem:[%s1 + $0xd0] sm:$0xff]
    %v68 = vld [vmem:[%s1 + $0xd8] sm:$0xff]
    %v69 = vld [vmem:[%s1 + $0xe0] sm:$0xff]
    %v70 = vld [vmem:[%s1 + $0xe8] sm:$0xff]
    %v71 = vld [vmem:[%s1 + $0xf0] sm:$0xff]
    %v72 = vld [vmem:[%s1 + $0xf8] sm:$0xff]
    %v73 = vld [vmem:[%s2] sm:$0x3]
    %v75 = vlaneseq
    %v76 = vshrl.u32 %v75, 7
    %v77 = vsub.s32 0, %v76
    %v78 = vrot.slane %v73, %v77
    %v79 = vlaneseq
    %v80 = vshrl.u32 %v79, 7
    %v81 = vsub.s32 1, %v80
    %v82 = vrot.slane %v73, %v81
    %85 = vmatprep.subr.mxu0 %v42
    %86 = vmatpush1.msra.mxu0 %v41
    %87 = vmatprep.subr.mxu0 %v44
    %88 = vmatpush1.msra.mxu0 %v43
    %89 = vmatprep.subr.mxu0 %v46
    %90 = vmatpush1.msra.mxu0 %v45
    %91 = vmatprep.subr.mxu0 %v48
    %92 = vmatpush1.msra.mxu0 %v47
    %93 = vmatprep.subr.mxu0 %v50
    %94 = vmatpush1.msra.mxu0 %v49
    %95 = vmatprep.subr.mxu0 %v52
    %96 = vmatpush1.msra.mxu0 %v51
    %97 = vmatprep.subr.mxu0 %v54
    %98 = vmatpush1.msra.mxu0 %v53
    %99 = vmatprep.subr.mxu0 %v56
    %100 = vmatpush1.msra.mxu0 %v55
    %101 = vmatprep.subr.mxu0 %v58
    %102 = vmatpush1.msra.mxu0 %v57
    %103 = vmatprep.subr.mxu0 %v60
    %104 = vmatpush1.msra.mxu0 %v59
    %105 = vmatprep.subr.mxu0 %v62
    %106 = vmatpush1.msra.mxu0 %v61
    %107 = vmatprep.subr.mxu0 %v64
    %108 = vmatpush1.msra.mxu0 %v63
    %109 = vmatprep.subr.mxu0 %v66
    %110 = vmatpush1.msra.mxu0 %v65
    %111 = vmatprep.subr.mxu0 %v68
    %112 = vmatpush1.msra.mxu0 %v67
    %113 = vmatprep.subr.mxu0 %v70
    %114 = vmatpush1.msra.mxu0 %v69
    %115 = vmatprep.subr.mxu0 %v72
    %116 = vmatpush1.msra.mxu0 %v71
    %117 = vmatprep.subr.mxu0 0.0
    %118 = vmatpush1.msra.mxu0 0.0
    %119 = vmatprep.subr.mxu0 0.0
    %120 = vmatpush1.msra.mxu0 0.0
    %121 = vmatprep.subr.mxu0 0.0
    %122 = vmatpush1.msra.mxu0 0.0
    %123 = vmatprep.subr.mxu0 0.0
    %124 = vmatpush1.msra.mxu0 0.0
    %125 = vmatprep.subr.mxu0 0.0
    %126 = vmatpush1.msra.mxu0 0.0
    %127 = vmatprep.subr.mxu0 0.0
    %128 = vmatpush1.msra.mxu0 0.0
    %129 = vmatprep.subr.mxu0 0.0
    %130 = vmatpush1.msra.mxu0 0.0
    %131 = vmatprep.subr.mxu0 0.0
    %132 = vmatpush1.msra.mxu0 0.0
    %133 = vmatprep.subr.mxu0 0.0
    %134 = vmatpush1.msra.mxu0 0.0
    %135 = vmatprep.subr.mxu0 0.0
    %136 = vmatpush1.msra.mxu0 0.0
    %137 = vmatprep.subr.mxu0 0.0
    %138 = vmatpush1.msra.mxu0 0.0
    %139 = vmatprep.subr.mxu0 0.0
    %140 = vmatpush1.msra.mxu0 0.0
    %141 = vmatprep.subr.mxu0 0.0
    %142 = vmatpush1.msra.mxu0 0.0
    %143 = vmatprep.subr.mxu0 0.0
    %144 = vmatpush1.msra.mxu0 0.0
    %145 = vmatprep.subr.mxu0 0.0
    %146 = vmatpush1.msra.mxu0 0.0
    %147 = vmatprep.subr.mxu0 0.0
    %148 = vmatpush1.msra.mxu0 0.0
    %149 = vmatprep.mubr.f32.mxu0 0.0
    %150 = vmatmul.mubr.f32.gmra.mrb[0].mxu0 %v40
    %v151 = vpop.f32.mrb[0].mxu0
    %v152 = vadd.f32 %v78, %v151
    %v153 = vpop.f32.mrb[0].mxu0
    %v154 = vadd.f32 %v82, %v153
    %155 = vdwg.mxu0
    %v156 = vmax.f32 %v152, 0.0
    %v157 = vmax.f32 %v154, 0.0
    %v158 = vld [vmem:[#allocation2] sm:$0xff]
    %v159 = vld [vmem:[#allocation2 + $0x8] sm:$0xff]
    %v160 = vld [vmem:[#allocation2 + $0x10] sm:$0xff]
    %v161 = vld [vmem:[#allocation2 + $0x18] sm:$0xff]
    %v162 = vld [vmem:[#allocation2 + $0x20] sm:$0xff]
    %v163 = vld [vmem:[#allocation2 + $0x28] sm:$0xff]
    %v164 = vld [vmem:[#allocation2 + $0x30] sm:$0xff]
    %v165 = vld [vmem:[#allocation2 + $0x38] sm:$0xff]
    %v166 = vld [vmem:[#allocation2 + $0x40] sm:$0xff]
    %v167 = vld [vmem:[#allocation2 + $0x48] sm:$0xff]
    %v168 = vld [vmem:[#allocation2 + $0x50] sm:$0xff]
    %v169 = vld [vmem:[#allocation2 + $0x58] sm:$0xff]
    %v170 = vld [vmem:[#allocation2 + $0x60] sm:$0xff]
    %v171 = vld [vmem:[#allocation2 + $0x68] sm:$0xff]
    %v172 = vld [vmem:[#allocation2 + $0x70] sm:$0xff]
    %v173 = vld [vmem:[#allocation2 + $0x78] sm:$0xff]
    %v174 = vld [vmem:[#allocation2 + $0x80] sm:$0xff]
    %v175 = vld [vmem:[#allocation2 + $0x88] sm:$0xff]
    %v176 = vld [vmem:[#allocation2 + $0x90] sm:$0xff]
    %v177 = vld [vmem:[#allocation2 + $0x98] sm:$0xff]
    %v178 = vld [vmem:[#allocation2 + $0xa0] sm:$0xff]
    %v179 = vld [vmem:[#allocation2 + $0xa8] sm:$0xff]
    %v180 = vld [vmem:[#allocation2 + $0xb0] sm:$0xff]
    %v181 = vld [vmem:[#allocation2 + $0xb8] sm:$0xff]
    %v182 = vld [vmem:[#allocation2 + $0xc0] sm:$0xff]
    %v183 = vld [vmem:[#allocation2 + $0xc8] sm:$0xff]
    %v184 = vld [vmem:[#allocation2 + $0xd0] sm:$0xff]
    %v185 = vld [vmem:[#allocation2 + $0xd8] sm:$0xff]
    %v186 = vld [vmem:[#allocation2 + $0xe0] sm:$0xff]
    %v187 = vld [vmem:[#allocation2 + $0xe8] sm:$0xff]
    %v188 = vld [vmem:[#allocation2 + $0xf0] sm:$0xff]
    %v189 = vld [vmem:[#allocation2 + $0xf8] sm:$0xff]
    %v190 = vld [vmem:[#allocation2 + $0x100] sm:$0xff]
    %v191 = vld [vmem:[#allocation2 + $0x108] sm:$0xff]
    %v192 = vld [vmem:[#allocation2 + $0x110] sm:$0xff]
    %v193 = vld [vmem:[#allocation2 + $0x118] sm:$0xff]
    %v194 = vld [vmem:[#allocation2 + $0x120] sm:$0xff]
    %v195 = vld [vmem:[#allocation2 + $0x128] sm:$0xff]
    %v196 = vld [vmem:[#allocation2 + $0x130] sm:$0xff]
    %v197 = vld [vmem:[#allocation2 + $0x138] sm:$0xff]
    %v198 = vld [vmem:[#allocation2 + $0x140] sm:$0xff]
    %v199 = vld [vmem:[#allocation2 + $0x148] sm:$0xff]
    %v200 = vld [vmem:[#allocation2 + $0x150] sm:$0xff]
    %v201 = vld [vmem:[#allocation2 + $0x158] sm:$0xff]
    %v202 = vld [vmem:[#allocation2 + $0x160] sm:$0xff]
    %v203 = vld [vmem:[#allocation2 + $0x168] sm:$0xff]
    %v204 = vld [vmem:[#allocation2 + $0x170] sm:$0xff]
    %v205 = vld [vmem:[#allocation2 + $0x178] sm:$0xff]
    %v206 = vld [vmem:[#allocation2 + $0x180] sm:$0xff]
    %v207 = vld [vmem:[#allocation2 + $0x188] sm:$0xff]
    %v208 = vld [vmem:[#allocation2 + $0x190] sm:$0xff]
    %v209 = vld [vmem:[#allocation2 + $0x198] sm:$0xff]
    %v210 = vld [vmem:[#allocation2 + $0x1a0] sm:$0xff]
    %v211 = vld [vmem:[#allocation2 + $0x1a8] sm:$0xff]
    %v212 = vld [vmem:[#allocation2 + $0x1b0] sm:$0xff]
    %v213 = vld [vmem:[#allocation2 + $0x1b8] sm:$0xff]
    %v214 = vld [vmem:[#allocation2 + $0x1c0] sm:$0xff]
    %v215 = vld [vmem:[#allocation2 + $0x1c8] sm:$0xff]
    %v216 = vld [vmem:[#allocation2 + $0x1d0] sm:$0xff]
    %v217 = vld [vmem:[#allocation2 + $0x1d8] sm:$0xff]
    %v218 = vld [vmem:[#allocation2 + $0x1e0] sm:$0xff]
    %v219 = vld [vmem:[#allocation2 + $0x1e8] sm:$0xff]
    %v220 = vld [vmem:[#allocation2 + $0x1f0] sm:$0xff]
    %v221 = vld [vmem:[#allocation2 + $0x1f8] sm:$0xff]
    %v222 = vld [vmem:[%s4] sm:$0x3]
    %v224 = vlaneseq
    %v225 = vshrl.u32 %v224, 7
    %v226 = vsub.s32 0, %v225
    %v227 = vrot.slane %v222, %v226
    %v228 = vlaneseq
    %v229 = vshrl.u32 %v228, 7
    %v230 = vsub.s32 1, %v229
    %v231 = vrot.slane %v222, %v230
    %234 = vmatprep.subr.mxu0 %v159
    %235 = vmatpush1.msra.mxu0 %v158
    %236 = vmatprep.subr.mxu0 %v161
    %237 = vmatpush1.msra.mxu0 %v160
    %238 = vmatprep.subr.mxu0 %v163
    %239 = vmatpush1.msra.mxu0 %v162
    %240 = vmatprep.subr.mxu0 %v165
    %241 = vmatpush1.msra.mxu0 %v164
    %242 = vmatprep.subr.mxu0 %v167
    %243 = vmatpush1.msra.mxu0 %v166
    %244 = vmatprep.subr.mxu0 %v169
    %245 = vmatpush1.msra.mxu0 %v168
    %246 = vmatprep.subr.mxu0 %v171
    %247 = vmatpush1.msra.mxu0 %v170
    %248 = vmatprep.subr.mxu0 %v173
    %249 = vmatpush1.msra.mxu0 %v172
    %250 = vmatprep.subr.mxu0 %v175
    %251 = vmatpush1.msra.mxu0 %v174
    %252 = vmatprep.subr.mxu0 %v177
    %253 = vmatpush1.msra.mxu0 %v176
    %254 = vmatprep.subr.mxu0 %v179
    %255 = vmatpush1.msra.mxu0 %v178
    %256 = vmatprep.subr.mxu0 %v181
    %257 = vmatpush1.msra.mxu0 %v180
    %258 = vmatprep.subr.mxu0 %v183
    %259 = vmatpush1.msra.mxu0 %v182
    %260 = vmatprep.subr.mxu0 %v185
    %261 = vmatpush1.msra.mxu0 %v184
    %262 = vmatprep.subr.mxu0 %v187
    %263 = vmatpush1.msra.mxu0 %v186
    %264 = vmatprep.subr.mxu0 %v189
    %265 = vmatpush1.msra.mxu0 %v188
    %266 = vmatprep.subr.mxu0 %v191
    %267 = vmatpush1.msra.mxu0 %v190
    %268 = vmatprep.subr.mxu0 %v193
    %269 = vmatpush1.msra.mxu0 %v192
    %270 = vmatprep.subr.mxu0 %v195
    %271 = vmatpush1.msra.mxu0 %v194
    %272 = vmatprep.subr.mxu0 %v197
    %273 = vmatpush1.msra.mxu0 %v196
    %274 = vmatprep.subr.mxu0 %v199
    %275 = vmatpush1.msra.mxu0 %v198
    %276 = vmatprep.subr.mxu0 %v201
    %277 = vmatpush1.msra.mxu0 %v200
    %278 = vmatprep.subr.mxu0 %v203
    %279 = vmatpush1.msra.mxu0 %v202
    %280 = vmatprep.subr.mxu0 %v205
    %281 = vmatpush1.msra.mxu0 %v204
    %282 = vmatprep.subr.mxu0 %v207
    %283 = vmatpush1.msra.mxu0 %v206
    %284 = vmatprep.subr.mxu0 %v209
    %285 = vmatpush1.msra.mxu0 %v208
    %286 = vmatprep.subr.mxu0 %v211
    %287 = vmatpush1.msra.mxu0 %v210
    %288 = vmatprep.subr.mxu0 %v213
    %289 = vmatpush1.msra.mxu0 %v212
    %290 = vmatprep.subr.mxu0 %v215
    %291 = vmatpush1.msra.mxu0 %v214
    %292 = vmatprep.subr.mxu0 %v217
    %293 = vmatpush1.msra.mxu0 %v216
    %294 = vmatprep.subr.mxu0 %v219
    %295 = vmatpush1.msra.mxu0 %v218
    %296 = vmatprep.subr.mxu0 %v221
    %297 = vmatpush1.msra.mxu0 %v220
    %298 = vmatprep.mubr.f32.mxu0 %v157
    %299 = vmatmul.mubr.f32.gmra.mrb[0].mxu0 %v156
    %v300 = vpop.f32.mrb[0].mxu0
    %v301 = vadd.f32 %v227, %v300
    %v302 = vpop.f32.mrb[0].mxu0
    %v303 = vadd.f32 %v231, %v302
    %304 = vdwg.mxu0
    %v305 = vmax.f32 %v301, 0.0
    %v306 = vmax.f32 %v303, 0.0
    %v307 = vld [vmem:[%s5] sm:$0xff]
    %v308 = vld [vmem:[%s5 + $0x8] sm:$0xff]
    %v309 = vld [vmem:[%s5 + $0x10] sm:$0xff]
    %v310 = vld [vmem:[%s5 + $0x18] sm:$0xff]
    %v311 = vld [vmem:[%s5 + $0x20] sm:$0xff]
    %v312 = vld [vmem:[%s5 + $0x28] sm:$0xff]
    %v313 = vld [vmem:[%s5 + $0x30] sm:$0xff]
    %v314 = vld [vmem:[%s5 + $0x38] sm:$0xff]
    %v315 = vld [vmem:[%s5 + $0x40] sm:$0xff]
    %v316 = vld [vmem:[%s5 + $0x48] sm:$0xff]
    %v317 = vld [vmem:[%s5 + $0x50] sm:$0xff]
    %v318 = vld [vmem:[%s5 + $0x58] sm:$0xff]
    %v319 = vld [vmem:[%s5 + $0x60] sm:$0xff]
    %v320 = vld [vmem:[%s5 + $0x68] sm:$0xff]
    %v321 = vld [vmem:[%s5 + $0x70] sm:$0xff]
    %v322 = vld [vmem:[%s5 + $0x78] sm:$0xff]
    %v323 = vld [vmem:[%s5 + $0x80] sm:$0xff]
    %v324 = vld [vmem:[%s5 + $0x88] sm:$0xff]
    %v325 = vld [vmem:[%s5 + $0x90] sm:$0xff]
    %v326 = vld [vmem:[%s5 + $0x98] sm:$0xff]
    %v327 = vld [vmem:[%s5 + $0xa0] sm:$0xff]
    %v328 = vld [vmem:[%s5 + $0xa8] sm:$0xff]
    %v329 = vld [vmem:[%s5 + $0xb0] sm:$0xff]
    %v330 = vld [vmem:[%s5 + $0xb8] sm:$0xff]
    %v331 = vld [vmem:[%s5 + $0xc0] sm:$0xff]
    %v332 = vld [vmem:[%s5 + $0xc8] sm:$0xff]
    %v333 = vld [vmem:[%s5 + $0xd0] sm:$0xff]
    %v334 = vld [vmem:[%s5 + $0xd8] sm:$0xff]
    %v335 = vld [vmem:[%s5 + $0xe0] sm:$0xff]
    %v336 = vld [vmem:[%s5 + $0xe8] sm:$0xff]
    %v337 = vld [vmem:[%s5 + $0xf0] sm:$0xff]
    %v338 = vld [vmem:[%s5 + $0xf8] sm:$0xff]
    %v339 = vld [vmem:[%s6] sm:$0x1]
    %v341 = vlaneseq
    %v342 = vshrl.u32 %v341, 7
    %v343 = vsub.s32 0, %v342
    %v344 = vrot.slane %v339, %v343
    %346 = vmatprep.subr.mxu0 0.0
    %347 = vmatpush1.msra.mxu0 %v307
    %348 = vmatprep.subr.mxu0 0.0
    %349 = vmatpush1.msra.mxu0 %v308
    %350 = vmatprep.subr.mxu0 0.0
    %351 = vmatpush1.msra.mxu0 %v309
    %352 = vmatprep.subr.mxu0 0.0
    %353 = vmatpush1.msra.mxu0 %v310
    %354 = vmatprep.subr.mxu0 0.0
    %355 = vmatpush1.msra.mxu0 %v311
    %356 = vmatprep.subr.mxu0 0.0
    %357 = vmatpush1.msra.mxu0 %v312
    %358 = vmatprep.subr.mxu0 0.0
    %359 = vmatpush1.msra.mxu0 %v313
    %360 = vmatprep.subr.mxu0 0.0
    %361 = vmatpush1.msra.mxu0 %v314
    %362 = vmatprep.subr.mxu0 0.0
    %363 = vmatpush1.msra.mxu0 %v315
    %364 = vmatprep.subr.mxu0 0.0
    %365 = vmatpush1.msra.mxu0 %v316
    %366 = vmatprep.subr.mxu0 0.0
    %367 = vmatpush1.msra.mxu0 %v317
    %368 = vmatprep.subr.mxu0 0.0
    %369 = vmatpush1.msra.mxu0 %v318
    %370 = vmatprep.subr.mxu0 0.0
    %371 = vmatpush1.msra.mxu0 %v319
    %372 = vmatprep.subr.mxu0 0.0
    %373 = vmatpush1.msra.mxu0 %v320
    %374 = vmatprep.subr.mxu0 0.0
    %375 = vmatpush1.msra.mxu0 %v321
    %376 = vmatprep.subr.mxu0 0.0
    %377 = vmatpush1.msra.mxu0 %v322
    %378 = vmatprep.subr.mxu0 0.0
    %379 = vmatpush1.msra.mxu0 %v323
    %380 = vmatprep.subr.mxu0 0.0
    %381 = vmatpush1.msra.mxu0 %v324
    %382 = vmatprep.subr.mxu0 0.0
    %383 = vmatpush1.msra.mxu0 %v325
    %384 = vmatprep.subr.mxu0 0.0
    %385 = vmatpush1.msra.mxu0 %v326
    %386 = vmatprep.subr.mxu0 0.0
    %387 = vmatpush1.msra.mxu0 %v327
    %388 = vmatprep.subr.mxu0 0.0
    %389 = vmatpush1.msra.mxu0 %v328
    %390 = vmatprep.subr.mxu0 0.0
    %391 = vmatpush1.msra.mxu0 %v329
    %392 = vmatprep.subr.mxu0 0.0
    %393 = vmatpush1.msra.mxu0 %v330
    %394 = vmatprep.subr.mxu0 0.0
    %395 = vmatpush1.msra.mxu0 %v331
    %396 = vmatprep.subr.mxu0 0.0
    %397 = vmatpush1.msra.mxu0 %v332
    %398 = vmatprep.subr.mxu0 0.0
    %399 = vmatpush1.msra.mxu0 %v333
    %400 = vmatprep.subr.mxu0 0.0
    %401 = vmatpush1.msra.mxu0 %v334
    %402 = vmatprep.subr.mxu0 0.0
    %403 = vmatpush1.msra.mxu0 %v335
    %404 = vmatprep.subr.mxu0 0.0
    %405 = vmatpush1.msra.mxu0 %v336
    %406 = vmatprep.subr.mxu0 0.0
    %407 = vmatpush1.msra.mxu0 %v337
    %408 = vmatprep.subr.mxu0 0.0
    %409 = vmatpush1.msra.mxu0 %v338
    %410 = vmatprep.mubr.f32.mxu0 %v306
    %411 = vmatmul.mubr.f32.gmra.mrb[0].mxu0 %v305
    %v412 = vpop.f32.mrb[0].mxu0
    %v413 = vadd.f32 %v344, %v412
    %v414 = vpop.f32.mrb[0].mxu0
    %415 = vdwg.mxu0
    %vm416 = vcmask 287744
    %417 = vst.msk [vmem:[%s7] sm:$0x3] %vm416, %v413
    // Predicated region
    $region34: #{single_policy_value_net.1} parent=1 // pred_check
      _
    $region35: #{single_policy_value_net.1} parent=1 // pred_check_branch
      %419 = sbr.rel (0) target = $region37
    $region36: #{single_policy_value_net.1} parent=1 // pred_region
      _
    $region37: #{single_policy_value_net.1} parent=1 // pred_fallthru
      _
    // Predicated region
    $region38: #{single_policy_value_net.1} parent=1 // pred_check
      _
    $region39: #{single_policy_value_net.1} parent=1 // pred_check_branch
      %421 = sbr.rel (0) target = $region41
    $region40: #{single_policy_value_net.1} parent=1 // pred_region
      _
    $region41: #{single_policy_value_net.1} parent=1 // pred_fallthru
      _
    %422 = vsyncpa [#allocation3], 1

</llo_original>
